<compile_context>
chip_gen: v5e
topology: v5e:2x2
jax: 0.10.0
libtpu: 0.0.40
codegen_flags: <defaults>
</compile_context>

<pallas_src>
import functools

import jax
import jax.numpy as jnp
from jax import lax
from jax.experimental import pallas as pl
from jax.experimental.pallas import tpu as pltpu

BN_EPS = 1e-5

# TODO(synk): at realistic ResNet channel counts set MATMUL_DTYPE = jnp.bfloat16 on
# v6e/v7x (MXU is bf16-native; keep preferred_element_type=f32 and keep all
# elementwise/BN math in f32, which also suits v5e's f32-only VPU/EUP).  Kept f32
# here: at these toy channel sizes the block is layout/overhead-bound, not MXU-bound.
MATMUL_DTYPE = jnp.float32


def resnet_block_kernel(x_ref, mask_ref, w1_ref, g1_ref, be1_ref,
                        w2_ref, g2_ref, be2_ref,
                        w3_ref, g3_ref, be3_ref,
                        out_ref, *, wdim, matmul_dtype):
    cin, m = x_ref.shape          # channel-major: channels on sublanes, M=N*H*W lanes
    inv_m = 1.0 / m

    def mm(w_ref, a):
        # MXU matmul; operands cast to matmul_dtype (bf16 at real sizes), f32 accum.
        return jnp.dot(w_ref[...].astype(matmul_dtype), a.astype(matmul_dtype),
                       preferred_element_type=jnp.float32)

    def batchnorm(y, g_ref, b_ref):
        # Training-mode BatchNorm2d over the M = N*H*W lane axis (biased variance).
        # sum and sum-of-squares are stacked along sublanes so a single XLU lane
        # reduction produces both; rsqrt goes to the EUP.
        c = y.shape[0]
        sums = jnp.sum(jnp.concatenate([y, y * y], axis=0), axis=1, keepdims=True)
        mean = sums[:c] * inv_m
        var = sums[c:] * inv_m - mean * mean
        # TODO(synk): switch to two-pass / shifted accumulation when M grows (the
        # single-pass E[x^2]-E[x]^2 form can cancel catastrophically at scale).
        return (y - mean) * lax.rsqrt(var + BN_EPS) * g_ref[...] + b_ref[...]

    x = x_ref[...]                                            # (Cin, M), lane-dense
    mask = mask_ref[...]                                      # (9, M) halo masks

    # ---- conv1: 1x1 conv == channel matmul, then BN + ReLU.  Conv bias omitted
    #      (cancelled by BN mean subtraction).  Output channels are pre-padded to
    #      a full 8-row sublane tile; pad rows stay exactly zero (gamma/beta pads
    #      are zero). ----
    h1 = jnp.maximum(batchnorm(mm(w1_ref, x), g1_ref, be1_ref), 0.0)        # (Cp, M)

    # ---- conv2: 3x3 / stride 1 / SAME as ONE im2col matmul (K = 9*Cp).  The 9
    #      spatial taps are XLU lane rolls of in-register data; SAME-padding
    #      boundaries are a multiply by the precomputed (9, M) mask slab. ----
    # TODO(synk): on v7x at large tiles, switch to 9 MRB-accumulated per-tap
    # matmuls (K = Cp each) to avoid materializing the 9x patches slab in VMEM.
    taps = []
    for di in range(3):
        for dj in range(3):
            oi, oj = di - 1, dj - 1
            off = oi * wdim + oj
            t = di * 3 + dj
            shifted = h1 if off == 0 else pltpu.roll(h1, shift=(-off) % m, axis=1)
            taps.append(shifted if off == 0 else shifted * mask[t:t + 1, :])
    patches = jnp.concatenate(taps, axis=0)                                 # (9*Cp, M)
    h2 = jnp.maximum(batchnorm(mm(w2_ref, patches), g2_ref, be2_ref), 0.0)  # (Cp, M)

    # ---- conv3: 1x1 expansion conv == channel matmul, then BN ----
    h3 = batchnorm(mm(w3_ref, h2), g3_ref, be3_ref)                         # (Cout, M)

    # ---- residual add (identity_downsample is None => Cin == Cout) + ReLU.
    #      (Cout, M) store is a full-width, unmasked vst. ----
    out_ref[...] = jnp.maximum(h3 + x, 0.0)


@functools.partial(jax.jit, static_argnames=("hdim", "wdim"))
def resnet_block_cm(x_cm, params, *, hdim, wdim):
    """Fused ResNet bottleneck block on channel-major activations (C, N*H*W).

    Kernel I/O stays channel-major so that, in a stacked ResNet, the NCHW <-> (C, M)
    conversion is paid exactly once at the network boundary, not per block.
    """
    p = params
    cin, M = x_cm.shape
    cmid = p["w1"].shape[0]
    cout = p["w3"].shape[0]
    assert cin == cout, "identity_downsample is None -> in_channels == out_channels*4"

    # Pad conv1/conv2 output channels (and conv3's K dim) to a full f32 sublane
    # tile (8) so every matmul operand and BN tensor is whole-vreg aligned.  Pad
    # gammas/betas are zero, so padded channels stay exactly zero end to end.
    cp = -(-cmid // 8) * 8
    pad = cp - cmid
    w1p = jnp.pad(p["w1"], ((0, pad), (0, 0)))
    g1p = jnp.pad(p["g1"], ((0, pad), (0, 0)))
    be1p = jnp.pad(p["be1"], ((0, pad), (0, 0)))
    w2p = jnp.pad(p["w2"].reshape(cmid, 9, cmid),
                  ((0, pad), (0, 0), (0, pad))).reshape(cp, 9 * cp)
    g2p = jnp.pad(p["g2"], ((0, pad), (0, 0)))
    be2p = jnp.pad(p["be2"], ((0, pad), (0, 0)))
    w3p = jnp.pad(p["w3"], ((0, 0), (0, pad)))

    # Precomputed SAME-padding boundary masks: (9, M) 0/1, one row per 3x3 tap.
    # Built from static H/W at trace time -> a constant kernel input, no in-kernel
    # integer div/mod/compare work.
    midx = jnp.arange(M, dtype=jnp.int32)
    wi = midx % wdim
    hi = (midx // wdim) % hdim
    rows = []
    for di in range(3):
        for dj in range(3):
            oi, oj = di - 1, dj - 1
            valid = ((hi + oi >= 0) & (hi + oi < hdim) &
                     (wi + oj >= 0) & (wi + oj < wdim))
            rows.append(valid.astype(jnp.float32))
    mask = jnp.stack(rows, axis=0)

    args = (x_cm.astype(jnp.float32), mask, w1p, g1p, be1p,
            w2p, g2p, be2p, w3p, p["g3"], p["be3"])

    kernel = functools.partial(resnet_block_kernel, wdim=wdim,
                               matmul_dtype=MATMUL_DTYPE)

    # TODO(synk): for real ResNet shapes (e.g. N=32, 56x56x256) re-tile: band the
    # M axis in 512-2048 lane tiles with a 1-row halo (in-tile rolls are no longer
    # valid across tile edges), split BN into a stats pass + normalize pass (or
    # fold running stats for inference), mark the band axis "parallel" (2 TCs on
    # v7x), keep weight index_maps constant along M so weights DMA once, raise
    # vmem_limit_bytes on v6e, and halve band sizes on v7x's 64 MiB VMEM.  At this
    # toy size (<16 KiB resident) a single grid step is deliberate: the ~0.35us
    # per-grid-step overhead would dominate.
    out_cm = pl.pallas_call(
        kernel,
        out_shape=jax.ShapeDtypeStruct((cout, M), jnp.float32),
        grid=(1,),
        in_specs=[pl.BlockSpec(a.shape, lambda i: (0, 0)) for a in args],
        out_specs=pl.BlockSpec((cout, M), lambda i: (0, 0)),
        compiler_params=pltpu.CompilerParams(dimension_semantics=("arbitrary",)),
    )(*args)
    return out_cm


def nchw_to_cm(x_nchw):
    """One-time network-boundary conversion NCHW -> channel-major (C, N*H*W)."""
    n, c, h, w = x_nchw.shape
    return jnp.transpose(x_nchw, (1, 0, 2, 3)).reshape(c, n * h * w)


def cm_to_nchw(x_cm, n, h, w):
    c = x_cm.shape[0]
    return jnp.transpose(x_cm.reshape(c, n, h, w), (1, 0, 2, 3))


def make_params(key, in_channels, out_channels):
    expansion = 4
    cmid = out_channels
    cout = out_channels * expansion
    ks = jax.random.split(key, 6)

    def u(k, shape, fan_in):
        bound = 1.0 / float(fan_in) ** 0.5
        return jax.random.uniform(k, shape, jnp.float32, -bound, bound)

    return dict(
        # conv weights in channel-major matmul form:
        #   1x1 convs as (Cout, Cin); 3x3 conv as (Cout, 9*Cin) with column index
        #   k = (di*3 + dj)*Cin + ci  (SAME-padding taps, tap-major).
        # b1/b2/b3 mirror nn.Conv2d(bias=True) and are used ONLY by the pure-JAX
        # reference; the kernel omits them because training-mode BN's mean
        # subtraction cancels pre-BN per-channel biases exactly.
        w1=u(ks[0], (cmid, in_channels), in_channels),
        b1=u(ks[1], (cmid, 1), in_channels),
        g1=jnp.ones((cmid, 1), jnp.float32),
        be1=jnp.zeros((cmid, 1), jnp.float32),
        w2=u(ks[2], (cmid, 9 * cmid), 9 * cmid),
        b2=u(ks[3], (cmid, 1), 9 * cmid),
        g2=jnp.ones((cmid, 1), jnp.float32),
        be2=jnp.zeros((cmid, 1), jnp.float32),
        w3=u(ks[4], (cout, cmid), cmid),
        b3=u(ks[5], (cout, 1), cmid),
        g3=jnp.ones((cout, 1), jnp.float32),
        be3=jnp.zeros((cout, 1), jnp.float32),
    )


def reference_forward(x_nchw, p):
    """Pure-JAX reference mirroring the PyTorch forward (training-mode BN,
    conv biases included as in nn.Conv2d's default bias=True)."""
    x = jnp.transpose(x_nchw, (0, 2, 3, 1)).astype(jnp.float32)  # NHWC
    cmid = p["w1"].shape[0]

    def bn(a, g, b):
        mean = a.mean(axis=(0, 1, 2), keepdims=True)
        var = jnp.square(a - mean).mean(axis=(0, 1, 2), keepdims=True)
        return ((a - mean) * lax.rsqrt(var + BN_EPS) * g.reshape(1, 1, 1, -1)
                + b.reshape(1, 1, 1, -1))

    h = jnp.einsum("nhwc,oc->nhwo", x, p["w1"]) + p["b1"].reshape(1, 1, 1, -1)
    h = jax.nn.relu(bn(h, p["g1"], p["be1"]))
    w_hwio = p["w2"].reshape(cmid, 3, 3, cmid).transpose(1, 2, 3, 0)
    h = lax.conv_general_dilated(h, w_hwio, (1, 1), "SAME",
                                 dimension_numbers=("NHWC", "HWIO", "NHWC"))
    h = h + p["b2"].reshape(1, 1, 1, -1)
    h = jax.nn.relu(bn(h, p["g2"], p["be2"]))
    h = jnp.einsum("nhwc,oc->nhwo", h, p["w3"]) + p["b3"].reshape(1, 1, 1, -1)
    h = bn(h, p["g3"], p["be3"])
    out = jax.nn.relu(h + x)
    return jnp.transpose(out, (0, 3, 1, 2))


if __name__ == "__main__":
    key = jax.random.PRNGKey(0)
    k_x, k_p = jax.random.split(key)

    in_channels, out_channels = 16, 4  # in_channels == out_channels * expansion(4)
    N, H, W = 2, 8, 8                  # M = N*H*W = 128 -> one lane-dense vreg row
    x = jax.random.normal(k_x, (N, in_channels, H, W), jnp.float32)
    params = make_params(k_p, in_channels, out_channels)

    # One-time boundary layout conversion; chained blocks would stay in (C, M).
    x_cm = nchw_to_cm(x)
    out_cm = jax.block_until_ready(resnet_block_cm(x_cm, params, hdim=H, wdim=W))
    out = cm_to_nchw(out_cm, N, H, W)
    assert out.shape == (N, in_channels, H, W)

    ref = reference_forward(x, params)
    max_err = float(jnp.max(jnp.abs(out - ref)))
    if max_err > 1e-2:
        raise AssertionError(f"mismatch vs reference: max abs err {max_err}")

    print("KERNEL_OK")
</pallas_src>

<mosaic_0001>
module attributes {stable_mosaic.version = 11 : i64} {
  func.func @resnet_block_kernel(%arg0: i32, %arg1: memref<16x128xf32, #tpu.memory_space<vmem>>, %arg2: memref<9x128xf32, #tpu.memory_space<vmem>>, %arg3: memref<8x16xf32, #tpu.memory_space<vmem>>, %arg4: memref<8x1xf32, #tpu.memory_space<vmem>>, %arg5: memref<8x1xf32, #tpu.memory_space<vmem>>, %arg6: memref<8x72xf32, #tpu.memory_space<vmem>>, %arg7: memref<8x1xf32, #tpu.memory_space<vmem>>, %arg8: memref<8x1xf32, #tpu.memory_space<vmem>>, %arg9: memref<16x8xf32, #tpu.memory_space<vmem>>, %arg10: memref<16x1xf32, #tpu.memory_space<vmem>>, %arg11: memref<16x1xf32, #tpu.memory_space<vmem>>, %arg12: memref<16x128xf32, #tpu.memory_space<vmem>>) attributes {dimension_semantics = [#tpu.dimension_semantics<arbitrary>], iteration_bounds = array<i64: 1>, scalar_prefetch = 0 : i64, scratch_operands = 0 : i64, tpu.core_type = #tpu.core_type<tc>, window_params = [{pipeline_mode = #tpu.pipeline_mode<synchronous>, transform_indices = @transform_0, window_bounds = array<i64: 16, 128>}, {pipeline_mode = #tpu.pipeline_mode<synchronous>, transform_indices = @transform_1, window_bounds = array<i64: 9, 128>}, {pipeline_mode = #tpu.pipeline_mode<synchronous>, transform_indices = @transform_2, window_bounds = array<i64: 8, 16>}, {pipeline_mode = #tpu.pipeline_mode<synchronous>, transform_indices = @transform_3, window_bounds = array<i64: 8, 1>}, {pipeline_mode = #tpu.pipeline_mode<synchronous>, transform_indices = @transform_4, window_bounds = array<i64: 8, 1>}, {pipeline_mode = #tpu.pipeline_mode<synchronous>, transform_indices = @transform_5, window_bounds = array<i64: 8, 72>}, {pipeline_mode = #tpu.pipeline_mode<synchronous>, transform_indices = @transform_6, window_bounds = array<i64: 8, 1>}, {pipeline_mode = #tpu.pipeline_mode<synchronous>, transform_indices = @transform_7, window_bounds = array<i64: 8, 1>}, {pipeline_mode = #tpu.pipeline_mode<synchronous>, transform_indices = @transform_8, window_bounds = array<i64: 16, 8>}, {pipeline_mode = #tpu.pipeline_mode<synchronous>, transform_indices = @transform_9, window_bounds = array<i64: 16, 1>}, {pipeline_mode = #tpu.pipeline_mode<synchronous>, transform_indices = @transform_10, window_bounds = array<i64: 16, 1>}, {pipeline_mode = #tpu.pipeline_mode<synchronous>, transform_indices = @transform_11, window_bounds = array<i64: 16, 128>}]} {
    %c0 = arith.constant 0 : index
    %c0_0 = arith.constant 0 : index
    %0 = vector.load %arg1[%c0, %c0_0] : memref<16x128xf32, #tpu.memory_space<vmem>>, vector<16x128xf32>
    %c0_1 = arith.constant 0 : index
    %c0_2 = arith.constant 0 : index
    %1 = vector.load %arg2[%c0_1, %c0_2] : memref<9x128xf32, #tpu.memory_space<vmem>>, vector<9x128xf32>
    %c0_3 = arith.constant 0 : index
    %c0_4 = arith.constant 0 : index
    %2 = vector.load %arg3[%c0_3, %c0_4] : memref<8x16xf32, #tpu.memory_space<vmem>>, vector<8x16xf32>
    %cst = arith.constant dense<0.000000e+00> : vector<8x128xf32>
    %3 = tpu.matmul %2, %0, %cst {dimension_numbers = #tpu.dot_dimension_numbers<[1], [0], [0], [1], [0, 0, 1, 1], [], []>} : vector<8x16xf32>, vector<16x128xf32>, vector<8x128xf32> -> vector<8x128xf32>
    %4 = arith.mulf %3, %3 : vector<8x128xf32>
    %5 = tpu.concatenate %3, %4 in 0 : vector<8x128xf32>, vector<8x128xf32> -> vector<16x128xf32>
    %cst_5 = arith.constant dense<0.000000e+00> : vector<16xf32>
    %6 = vector.multi_reduction <add>, %5, %cst_5 [1] : vector<16x128xf32> to vector<16xf32>
    %7 = vector.shape_cast %6 : vector<16xf32> to vector<16x1xf32>
    %8 = vector.extract_strided_slice %7 {offsets = [0, 0], sizes = [8, 1], strides = [1, 1]} : vector<16x1xf32> to vector<8x1xf32>
    %cst_6 = arith.constant 7.812500e-03 : f32
    %9 = vector.broadcast %cst_6 : f32 to vector<8x1xf32>
    %10 = arith.mulf %8, %9 : vector<8x1xf32>
    %11 = vector.extract_strided_slice %7 {offsets = [8, 0], sizes = [8, 1], strides = [1, 1]} : vector<16x1xf32> to vector<8x1xf32>
    %cst_7 = arith.constant 7.812500e-03 : f32
    %12 = vector.broadcast %cst_7 : f32 to vector<8x1xf32>
    %13 = arith.mulf %11, %12 : vector<8x1xf32>
    %14 = arith.mulf %10, %10 : vector<8x1xf32>
    %15 = arith.subf %13, %14 : vector<8x1xf32>
    %16 = vector.broadcast %10 : vector<8x1xf32> to vector<8x128xf32>
    %17 = arith.subf %3, %16 : vector<8x128xf32>
    %cst_8 = arith.constant 9.99999974E-6 : f32
    %18 = vector.broadcast %cst_8 : f32 to vector<8x1xf32>
    %19 = arith.addf %15, %18 : vector<8x1xf32>
    %20 = math.rsqrt %19 : vector<8x1xf32>
    %21 = vector.broadcast %20 : vector<8x1xf32> to vector<8x128xf32>
    %22 = arith.mulf %17, %21 : vector<8x128xf32>
    %c0_9 = arith.constant 0 : index
    %c0_10 = arith.constant 0 : index
    %23 = vector.load %arg4[%c0_9, %c0_10] : memref<8x1xf32, #tpu.memory_space<vmem>>, vector<8x1xf32>
    %24 = vector.broadcast %23 : vector<8x1xf32> to vector<8x128xf32>
    %25 = arith.mulf %22, %24 : vector<8x128xf32>
    %c0_11 = arith.constant 0 : index
    %c0_12 = arith.constant 0 : index
    %26 = vector.load %arg5[%c0_11, %c0_12] : memref<8x1xf32, #tpu.memory_space<vmem>>, vector<8x1xf32>
    %27 = vector.broadcast %26 : vector<8x1xf32> to vector<8x128xf32>
    %28 = arith.addf %25, %27 : vector<8x128xf32>
    %cst_13 = arith.constant 0.000000e+00 : f32
    %29 = vector.broadcast %cst_13 : f32 to vector<8x128xf32>
    %30 = arith.maximumf %28, %29 : vector<8x128xf32>
    %c9_i32 = arith.constant 9 : i32
    %31 = tpu.dynamic_rotate %30 by %c9_i32 dim 1 : vector<8x128xf32>, i32 -> vector<8x128xf32>
    %32 = vector.extract_strided_slice %1 {offsets = [0, 0], sizes = [1, 128], strides = [1, 1]} : vector<9x128xf32> to vector<1x128xf32>
    %33 = vector.broadcast %32 : vector<1x128xf32> to vector<8x128xf32>
    %34 = arith.mulf %31, %33 : vector<8x128xf32>
    %c8_i32 = arith.constant 8 : i32
    %35 = tpu.dynamic_rotate %30 by %c8_i32 dim 1 : vector<8x128xf32>, i32 -> vector<8x128xf32>
    %36 = vector.extract_strided_slice %1 {offsets = [1, 0], sizes = [1, 128], strides = [1, 1]} : vector<9x128xf32> to vector<1x128xf32>
    %37 = vector.broadcast %36 : vector<1x128xf32> to vector<8x128xf32>
    %38 = arith.mulf %35, %37 : vector<8x128xf32>
    %c7_i32 = arith.constant 7 : i32
    %39 = tpu.dynamic_rotate %30 by %c7_i32 dim 1 : vector<8x128xf32>, i32 -> vector<8x128xf32>
    %40 = vector.extract_strided_slice %1 {offsets = [2, 0], sizes = [1, 128], strides = [1, 1]} : vector<9x128xf32> to vector<1x128xf32>
    %41 = vector.broadcast %40 : vector<1x128xf32> to vector<8x128xf32>
    %42 = arith.mulf %39, %41 : vector<8x128xf32>
    %c1_i32 = arith.constant 1 : i32
    %43 = tpu.dynamic_rotate %30 by %c1_i32 dim 1 : vector<8x128xf32>, i32 -> vector<8x128xf32>
    %44 = vector.extract_strided_slice %1 {offsets = [3, 0], sizes = [1, 128], strides = [1, 1]} : vector<9x128xf32> to vector<1x128xf32>
    %45 = vector.broadcast %44 : vector<1x128xf32> to vector<8x128xf32>
    %46 = arith.mulf %43, %45 : vector<8x128xf32>
    %c127_i32 = arith.constant 127 : i32
    %47 = tpu.dynamic_rotate %30 by %c127_i32 dim 1 : vector<8x128xf32>, i32 -> vector<8x128xf32>
    %48 = vector.extract_strided_slice %1 {offsets = [5, 0], sizes = [1, 128], strides = [1, 1]} : vector<9x128xf32> to vector<1x128xf32>
    %49 = vector.broadcast %48 : vector<1x128xf32> to vector<8x128xf32>
    %50 = arith.mulf %47, %49 : vector<8x128xf32>
    %c121_i32 = arith.constant 121 : i32
    %51 = tpu.dynamic_rotate %30 by %c121_i32 dim 1 : vector<8x128xf32>, i32 -> vector<8x128xf32>
    %52 = vector.extract_strided_slice %1 {offsets = [6, 0], sizes = [1, 128], strides = [1, 1]} : vector<9x128xf32> to vector<1x128xf32>
    %53 = vector.broadcast %52 : vector<1x128xf32> to vector<8x128xf32>
    %54 = arith.mulf %51, %53 : vector<8x128xf32>
    %c120_i32 = arith.constant 120 : i32
    %55 = tpu.dynamic_rotate %30 by %c120_i32 dim 1 : vector<8x128xf32>, i32 -> vector<8x128xf32>
    %56 = vector.extract_strided_slice %1 {offsets = [7, 0], sizes = [1, 128], strides = [1, 1]} : vector<9x128xf32> to vector<1x128xf32>
    %57 = vector.broadcast %56 : vector<1x128xf32> to vector<8x128xf32>
    %58 = arith.mulf %55, %57 : vector<8x128xf32>
    %c119_i32 = arith.constant 119 : i32
    %59 = tpu.dynamic_rotate %30 by %c119_i32 dim 1 : vector<8x128xf32>, i32 -> vector<8x128xf32>
    %60 = vector.extract_strided_slice %1 {offsets = [8, 0], sizes = [1, 128], strides = [1, 1]} : vector<9x128xf32> to vector<1x128xf32>
    %61 = vector.broadcast %60 : vector<1x128xf32> to vector<8x128xf32>
    %62 = arith.mulf %59, %61 : vector<8x128xf32>
    %63 = tpu.concatenate %34, %38, %42, %46, %30, %50, %54, %58, %62 in 0 : vector<8x128xf32>, vector<8x128xf32>, vector<8x128xf32>, vector<8x128xf32>, vector<8x128xf32>, vector<8x128xf32>, vector<8x128xf32>, vector<8x128xf32>, vector<8x128xf32> -> vector<72x128xf32>
    %c0_14 = arith.constant 0 : index
    %c0_15 = arith.constant 0 : index
    %64 = vector.load %arg6[%c0_14, %c0_15] : memref<8x72xf32, #tpu.memory_space<vmem>>, vector<8x72xf32>
    %cst_16 = arith.constant dense<0.000000e+00> : vector<8x128xf32>
    %65 = tpu.matmul %64, %63, %cst_16 {dimension_numbers = #tpu.dot_dimension_numbers<[1], [0], [0], [1], [0, 0, 1, 1], [], []>} : vector<8x72xf32>, vector<72x128xf32>, vector<8x128xf32> -> vector<8x128xf32>
    %66 = arith.mulf %65, %65 : vector<8x128xf32>
    %67 = tpu.concatenate %65, %66 in 0 : vector<8x128xf32>, vector<8x128xf32> -> vector<16x128xf32>
    %cst_17 = arith.constant dense<0.000000e+00> : vector<16xf32>
    %68 = vector.multi_reduction <add>, %67, %cst_17 [1] : vector<16x128xf32> to vector<16xf32>
    %69 = vector.shape_cast %68 : vector<16xf32> to vector<16x1xf32>
    %70 = vector.extract_strided_slice %69 {offsets = [0, 0], sizes = [8, 1], strides = [1, 1]} : vector<16x1xf32> to vector<8x1xf32>
    %cst_18 = arith.constant 7.812500e-03 : f32
    %71 = vector.broadcast %cst_18 : f32 to vector<8x1xf32>
    %72 = arith.mulf %70, %71 : vector<8x1xf32>
    %73 = vector.extract_strided_slice %69 {offsets = [8, 0], sizes = [8, 1], strides = [1, 1]} : vector<16x1xf32> to vector<8x1xf32>
    %cst_19 = arith.constant 7.812500e-03 : f32
    %74 = vector.broadcast %cst_19 : f32 to vector<8x1xf32>
    %75 = arith.mulf %73, %74 : vector<8x1xf32>
    %76 = arith.mulf %72, %72 : vector<8x1xf32>
    %77 = arith.subf %75, %76 : vector<8x1xf32>
    %78 = vector.broadcast %72 : vector<8x1xf32> to vector<8x128xf32>
    %79 = arith.subf %65, %78 : vector<8x128xf32>
    %cst_20 = arith.constant 9.99999974E-6 : f32
    %80 = vector.broadcast %cst_20 : f32 to vector<8x1xf32>
    %81 = arith.addf %77, %80 : vector<8x1xf32>
    %82 = math.rsqrt %81 : vector<8x1xf32>
    %83 = vector.broadcast %82 : vector<8x1xf32> to vector<8x128xf32>
    %84 = arith.mulf %79, %83 : vector<8x128xf32>
    %c0_21 = arith.constant 0 : index
    %c0_22 = arith.constant 0 : index
    %85 = vector.load %arg7[%c0_21, %c0_22] : memref<8x1xf32, #tpu.memory_space<vmem>>, vector<8x1xf32>
    %86 = vector.broadcast %85 : vector<8x1xf32> to vector<8x128xf32>
    %87 = arith.mulf %84, %86 : vector<8x128xf32>
    %c0_23 = arith.constant 0 : index
    %c0_24 = arith.constant 0 : index
    %88 = vector.load %arg8[%c0_23, %c0_24] : memref<8x1xf32, #tpu.memory_space<vmem>>, vector<8x1xf32>
    %89 = vector.broadcast %88 : vector<8x1xf32> to vector<8x128xf32>
    %90 = arith.addf %87, %89 : vector<8x128xf32>
    %cst_25 = arith.constant 0.000000e+00 : f32
    %91 = vector.broadcast %cst_25 : f32 to vector<8x128xf32>
    %92 = arith.maximumf %90, %91 : vector<8x128xf32>
    %c0_26 = arith.constant 0 : index
    %c0_27 = arith.constant 0 : index
    %93 = vector.load %arg9[%c0_26, %c0_27] : memref<16x8xf32, #tpu.memory_space<vmem>>, vector<16x8xf32>
    %cst_28 = arith.constant dense<0.000000e+00> : vector<16x128xf32>
    %94 = tpu.matmul %93, %92, %cst_28 {dimension_numbers = #tpu.dot_dimension_numbers<[1], [0], [0], [1], [0, 0, 1, 1], [], []>} : vector<16x8xf32>, vector<8x128xf32>, vector<16x128xf32> -> vector<16x128xf32>
    %95 = arith.mulf %94, %94 : vector<16x128xf32>
    %96 = tpu.concatenate %94, %95 in 0 : vector<16x128xf32>, vector<16x128xf32> -> vector<32x128xf32>
    %cst_29 = arith.constant dense<0.000000e+00> : vector<32xf32>
    %97 = vector.multi_reduction <add>, %96, %cst_29 [1] : vector<32x128xf32> to vector<32xf32>
    %98 = vector.shape_cast %97 : vector<32xf32> to vector<32x1xf32>
    %99 = vector.extract_strided_slice %98 {offsets = [0, 0], sizes = [16, 1], strides = [1, 1]} : vector<32x1xf32> to vector<16x1xf32>
    %cst_30 = arith.constant 7.812500e-03 : f32
    %100 = vector.broadcast %cst_30 : f32 to vector<16x1xf32>
    %101 = arith.mulf %99, %100 : vector<16x1xf32>
    %102 = vector.extract_strided_slice %98 {offsets = [16, 0], sizes = [16, 1], strides = [1, 1]} : vector<32x1xf32> to vector<16x1xf32>
    %cst_31 = arith.constant 7.812500e-03 : f32
    %103 = vector.broadcast %cst_31 : f32 to vector<16x1xf32>
    %104 = arith.mulf %102, %103 : vector<16x1xf32>
    %105 = arith.mulf %101, %101 : vector<16x1xf32>
    %106 = arith.subf %104, %105 : vector<16x1xf32>
    %107 = vector.broadcast %101 : vector<16x1xf32> to vector<16x128xf32>
    %108 = arith.subf %94, %107 : vector<16x128xf32>
    %cst_32 = arith.constant 9.99999974E-6 : f32
    %109 = vector.broadcast %cst_32 : f32 to vector<16x1xf32>
    %110 = arith.addf %106, %109 : vector<16x1xf32>
    %111 = math.rsqrt %110 : vector<16x1xf32>
    %112 = vector.broadcast %111 : vector<16x1xf32> to vector<16x128xf32>
    %113 = arith.mulf %108, %112 : vector<16x128xf32>
    %c0_33 = arith.constant 0 : index
    %c0_34 = arith.constant 0 : index
    %114 = vector.load %arg10[%c0_33, %c0_34] : memref<16x1xf32, #tpu.memory_space<vmem>>, vector<16x1xf32>
    %115 = vector.broadcast %114 : vector<16x1xf32> to vector<16x128xf32>
    %116 = arith.mulf %113, %115 : vector<16x128xf32>
    %c0_35 = arith.constant 0 : index
    %c0_36 = arith.constant 0 : index
    %117 = vector.load %arg11[%c0_35, %c0_36] : memref<16x1xf32, #tpu.memory_space<vmem>>, vector<16x1xf32>
    %118 = vector.broadcast %117 : vector<16x1xf32> to vector<16x128xf32>
    %119 = arith.addf %116, %118 : vector<16x128xf32>
    %120 = arith.addf %119, %0 : vector<16x128xf32>
    %cst_37 = arith.constant 0.000000e+00 : f32
    %121 = vector.broadcast %cst_37 : f32 to vector<16x128xf32>
    %122 = arith.maximumf %120, %121 : vector<16x128xf32>
    %c0_38 = arith.constant 0 : index
    %c0_39 = arith.constant 0 : index
    %123 = vector.load %arg12[%c0_38, %c0_39] : memref<16x128xf32, #tpu.memory_space<vmem>>, vector<16x128xf32>
    tpu.vector_store %arg12[%c0_38, %c0_39], %122 {strides = array<i32>} : memref<16x128xf32, #tpu.memory_space<vmem>>, vector<16x128xf32>,
    return
  }
  func.func @transform_0(%arg0: i32) -> (i32, i32) {
    %c0_i32 = arith.constant 0 : i32
    %c0_i32_0 = arith.constant 0 : i32
    %c0_i32_1 = arith.constant 0 : i32
    return %c0_i32, %c0_i32_0 : i32, i32
  }
  func.func @transform_1(%arg0: i32) -> (i32, i32) {
    %c0_i32 = arith.constant 0 : i32
    %c0_i32_0 = arith.constant 0 : i32
    %c0_i32_1 = arith.constant 0 : i32
    return %c0_i32, %c0_i32_0 : i32, i32
  }
  func.func @transform_2(%arg0: i32) -> (i32, i32) {
    %c0_i32 = arith.constant 0 : i32
    %c0_i32_0 = arith.constant 0 : i32
    %c0_i32_1 = arith.constant 0 : i32
    return %c0_i32, %c0_i32_0 : i32, i32
  }
  func.func @transform_3(%arg0: i32) -> (i32, i32) {
    %c0_i32 = arith.constant 0 : i32
    %c0_i32_0 = arith.constant 0 : i32
    %c0_i32_1 = arith.constant 0 : i32
    return %c0_i32, %c0_i32_0 : i32, i32
  }
  func.func @transform_4(%arg0: i32) -> (i32, i32) {
    %c0_i32 = arith.constant 0 : i32
    %c0_i32_0 = arith.constant 0 : i32
    %c0_i32_1 = arith.constant 0 : i32
    return %c0_i32, %c0_i32_0 : i32, i32
  }
  func.func @transform_5(%arg0: i32) -> (i32, i32) {
    %c0_i32 = arith.constant 0 : i32
    %c0_i32_0 = arith.constant 0 : i32
    %c0_i32_1 = arith.constant 0 : i32
    return %c0_i32, %c0_i32_0 : i32, i32
  }
  func.func @transform_6(%arg0: i32) -> (i32, i32) {
    %c0_i32 = arith.constant 0 : i32
    %c0_i32_0 = arith.constant 0 : i32
    %c0_i32_1 = arith.constant 0 : i32
    return %c0_i32, %c0_i32_0 : i32, i32
  }
  func.func @transform_7(%arg0: i32) -> (i32, i32) {
    %c0_i32 = arith.constant 0 : i32
    %c0_i32_0 = arith.constant 0 : i32
    %c0_i32_1 = arith.constant 0 : i32
    return %c0_i32, %c0_i32_0 : i32, i32
  }
  func.func @transform_8(%arg0: i32) -> (i32, i32) {
    %c0_i32 = arith.constant 0 : i32
    %c0_i32_0 = arith.constant 0 : i32
    %c0_i32_1 = arith.constant 0 : i32
    return %c0_i32, %c0_i32_0 : i32, i32
  }
  func.func @transform_9(%arg0: i32) -> (i32, i32) {
    %c0_i32 = arith.constant 0 : i32
    %c0_i32_0 = arith.constant 0 : i32
    %c0_i32_1 = arith.constant 0 : i32
    return %c0_i32, %c0_i32_0 : i32, i32
  }
  func.func @transform_10(%arg0: i32) -> (i32, i32) {
    %c0_i32 = arith.constant 0 : i32
    %c0_i32_0 = arith.constant 0 : i32
    %c0_i32_1 = arith.constant 0 : i32
    return %c0_i32, %c0_i32_0 : i32, i32
  }
  func.func @transform_11(%arg0: i32) -> (i32, i32) {
    %c0_i32 = arith.constant 0 : i32
    %c0_i32_0 = arith.constant 0 : i32
    %c0_i32_1 = arith.constant 0 : i32
    return %c0_i32, %c0_i32_0 : i32, i32
  }
}

</mosaic_0001>

<llo_original>
// kernel: resnet_block_cm.1
$region0: #{resnet_block_cm.1}
  #allocation0 [shape = 'u32[]', space=smem, size = 0x4, offset = 0x4, fixed_abs, tag = 'smem constant byte address 0x4 - core index']
  #allocation1 [shape = 'u32[72,128]{1,0:T(1,128)}', space=vmem, size = 0x9000, scoped, tag = 'internal scratch']
  %s0 = inlined_call_operand.vmem [shape: f32[16,128], index: 0, kind: input, shape index: {}]
  %s1 = inlined_call_operand.vmem [shape: f32[9,128], index: 1, kind: input, shape index: {}]
  %s2 = inlined_call_operand.vmem [shape: f32[8,16], index: 2, kind: input, shape index: {}]
  %s3 = inlined_call_operand.vmem [shape: f32[8,1], index: 3, kind: input, shape index: {}]
  %s4 = inlined_call_operand.vmem [shape: f32[8,1], index: 4, kind: input, shape index: {}]
  %s5 = inlined_call_operand.vmem [shape: f32[8,72], index: 5, kind: input, shape index: {}]
  %s6 = inlined_call_operand.vmem [shape: f32[8,1], index: 6, kind: input, shape index: {}]
  %s7 = inlined_call_operand.vmem [shape: f32[8,1], index: 7, kind: input, shape index: {}]
  %s8 = inlined_call_operand.vmem [shape: f32[16,8], index: 8, kind: input, shape index: {}]
  %s9 = inlined_call_operand.vmem [shape: f32[16,1], index: 9, kind: input, shape index: {}]
  %s10 = inlined_call_operand.vmem [shape: f32[16,1], index: 10, kind: input, shape index: {}]
  %s11 = inlined_call_operand.hbm [shape: f32[16,128], index: 11, kind: output, shape index: {}]
  %s12 = sld [smem:[#allocation0]]
  $region54: #{resnet_block_cm.1} parent=0
    _
  %s14 = ssub.s32 1, %s12
  %s15 = scalar_select 0, %s14, %s12
  $region1: #{resnet_block_cm.1} parent=0
    #allocation2 [shape = 'u8[8192]{0}', space=vmem, size = 0x2000, scoped, tag = 'output window, operand 0, single buffered']
    #allocation3 [shape = 's32[1]{0}', space=sflag, size = 0x4, scoped, tag = 'scoped memory for resnet_block_cm.1']
    %16 = vsyncpa [#allocation3], 0
    // Predicated region
    $region2: #{resnet_block_cm.1} parent=1 // pred_check
      _
    $region3: #{resnet_block_cm.1} parent=1 // pred_check_branch
      %18 = sbr.rel (0) target = $region5
    $region4: #{resnet_block_cm.1} parent=1 // pred_region
      _
    $region5: #{resnet_block_cm.1} parent=1 // pred_fallthru
      _
    // Predicated region
    $region6: #{resnet_block_cm.1} parent=1 // pred_check
      _
    $region7: #{resnet_block_cm.1} parent=1 // pred_check_branch
      %20 = sbr.rel (0) target = $region9
    $region8: #{resnet_block_cm.1} parent=1 // pred_region
      _
    $region9: #{resnet_block_cm.1} parent=1 // pred_fallthru
      _
    // Predicated region
    $region10: #{resnet_block_cm.1} parent=1 // pred_check
      _
    $region11: #{resnet_block_cm.1} parent=1 // pred_check_branch
      %22 = sbr.rel (0) target = $region13
    $region12: #{resnet_block_cm.1} parent=1 // pred_region
      _
    $region13: #{resnet_block_cm.1} parent=1 // pred_fallthru
      _
    // Predicated region
    $region14: #{resnet_block_cm.1} parent=1 // pred_check
      _
    $region15: #{resnet_block_cm.1} parent=1 // pred_check_branch
      %24 = sbr.rel (0) target = $region17
    $region16: #{resnet_block_cm.1} parent=1 // pred_region
      _
    $region17: #{resnet_block_cm.1} parent=1 // pred_fallthru
      _
    // Predicated region
    $region18: #{resnet_block_cm.1} parent=1 // pred_check
      _
    $region19: #{resnet_block_cm.1} parent=1 // pred_check_branch
      %26 = sbr.rel (0) target = $region21
    $region20: #{resnet_block_cm.1} parent=1 // pred_region
      _
    $region21: #{resnet_block_cm.1} parent=1 // pred_fallthru
      _
    // Predicated region
    $region22: #{resnet_block_cm.1} parent=1 // pred_check
      _
    $region23: #{resnet_block_cm.1} parent=1 // pred_check_branch
      %28 = sbr.rel (0) target = $region25
    $region24: #{resnet_block_cm.1} parent=1 // pred_region
      _
    $region25: #{resnet_block_cm.1} parent=1 // pred_fallthru
      _
    // Predicated region
    $region26: #{resnet_block_cm.1} parent=1 // pred_check
      _
    $region27: #{resnet_block_cm.1} parent=1 // pred_check_branch
      %30 = sbr.rel (0) target = $region29
    $region28: #{resnet_block_cm.1} parent=1 // pred_region
      _
    $region29: #{resnet_block_cm.1} parent=1 // pred_fallthru
      _
    // Predicated region
    $region30: #{resnet_block_cm.1} parent=1 // pred_check
      _
    $region31: #{resnet_block_cm.1} parent=1 // pred_check_branch
      %32 = sbr.rel (0) target = $region33
    $region32: #{resnet_block_cm.1} parent=1 // pred_region
      _
    $region33: #{resnet_block_cm.1} parent=1 // pred_fallthru
      _
    // Predicated region
    $region34: #{resnet_block_cm.1} parent=1 // pred_check
      _
    $region35: #{resnet_block_cm.1} parent=1 // pred_check_branch
      %34 = sbr.rel (0) target = $region37
    $region36: #{resnet_block_cm.1} parent=1 // pred_region
      _
    $region37: #{resnet_block_cm.1} parent=1 // pred_fallthru
      _
    // Predicated region
    $region38: #{resnet_block_cm.1} parent=1 // pred_check
      _
    $region39: #{resnet_block_cm.1} parent=1 // pred_check_branch
      %36 = sbr.rel (0) target = $region41
    $region40: #{resnet_block_cm.1} parent=1 // pred_region
      _
    $region41: #{resnet_block_cm.1} parent=1 // pred_fallthru
      _
    // Predicated region
    $region42: #{resnet_block_cm.1} parent=1 // pred_check
      _
    $region43: #{resnet_block_cm.1} parent=1 // pred_check_branch
      %38 = sbr.rel (0) target = $region45
    $region44: #{resnet_block_cm.1} parent=1 // pred_region
      _
    $region45: #{resnet_block_cm.1} parent=1 // pred_fallthru
      _
    %v39 = vld [vmem:[%s0] sm:$0xff]
    %v40 = vld [vmem:[%s0 + $0x8] sm:$0xff]
    %v41 = vld [vmem:[%s1] sm:$0xff]
    %v42 = vld [vmem:[%s1 + $0x8] sm:$0x1]
    %v43 = vld [vmem:[%s2] sm:$0xff]
    %vm44 = vcmask 130048
    %v46 = vsel %vm44, %v43, 0
    %48 = vmatpush.msra.mxu0 0.0
    %49 = vmatpush.msra.mxu0 0.0
    %50 = vmatpush.msra.mxu0 0.0
    %51 = vmatpush.msra.mxu0 0.0
    %52 = vmatpush.msra.mxu0 0.0
    %53 = vmatpush.msra.mxu0 0.0
    %54 = vmatpush.msra.mxu0 0.0
    %55 = vmatpush.msra.mxu0 0.0
    %56 = vmatpush.msra.mxu0 0.0
    %57 = vmatpush.msra.mxu0 0.0
    %58 = vmatpush.msra.mxu0 0.0
    %59 = vmatpush.msra.mxu0 0.0
    %60 = vmatpush.msra.mxu0 0.0
    %61 = vmatpush.msra.mxu0 0.0
    %62 = vmatpush.msra.mxu0 %v40
    %63 = vmatpush.msra.mxu0 %v39
    %64 = vmatmul.f32.gmra.mxu0 %v46
    %v65 = vpop.f32.mrf.mxu0
    %v66 = vadd.f32 0.0, %v65
    %67 = vdwg.mxu0
    %v68 = vmul.f32 %v66, %v66
    %69 = vadd.xlane.f32.xlu0 %v66
    %v70 = vpop.xlane.xlu0 %69
    %71 = vadd.xlane.f32.xlu0 %v68
    %v72 = vpop.xlane.xlu0 %71
    %v73 = vmul.f32 %v70, 0.0078125
    %v74 = vmul.f32 %v72, 0.0078125
    %v75 = vmul.f32 %v73, %v73
    %v76 = vsub.f32 %v74, %v75
    %v77 = vsub.f32 %v66, %v73
    %v78 = vadd.f32 %v76, 1e-05
    %v79 = vrsqrt.pop %v78
    %v80 = vmul.f32 %v79, %v78
    %v81 = vmul.f32 %v80, %v79
    %v82 = vmul.f32 0.5, %v81
    %v83 = vsub.f32 1.5, %v82
    %v84 = vmul.f32 %v79, %v83
    %vm85 = vweird.f32 %v78
    %vm86 = vweird.f32 %v79
    %vm87 = vmor %vm85, %vm86
    %v88 = vsel %vm87, %v79, %v84
    %v89 = vmul.f32 %v77, %v88
    %v90 = vld [vmem:[%s3] sm:$0xff]
    %92 = vset.pattern.permute.xlu0 0
    %93 = vperm.xlu0 %92, %v90
    %v94 = vpop.permute.xlu0 %93
    %v96 = vmul.f32 %v89, %v94
    %v97 = vld [vmem:[%s4] sm:$0xff]
    %99 = vset.pattern.permute.xlu0 0
    %100 = vperm.xlu0 %99, %v97
    %v101 = vpop.permute.xlu0 %100
    %v103 = vadd.f32 %v96, %v101
    %v104 = vmax.f32 %v103, 0.0
    %105 = vrot.lane.b32.xlu0 %v104, 9
    %v106 = vpop.permute.xlu0 %105
    %v107 = vperm.slane %v41, 0
    %v108 = vmul.f32 %v106, %v107
    %109 = vrot.lane.b32.xlu0 %v104, 8
    %v110 = vpop.permute.xlu0 %109
    %v111 = vperm.slane %v41, 1
    %v112 = vmul.f32 %v110, %v111
    %113 = vrot.lane.b32.xlu0 %v104, 7
    %v114 = vpop.permute.xlu0 %113
    %v115 = vperm.slane %v41, 2
    %v116 = vmul.f32 %v114, %v115
    %117 = vrot.lane.b32.xlu0 %v104, 1
    %v118 = vpop.permute.xlu0 %117
    %v119 = vperm.slane %v41, 3
    %v120 = vmul.f32 %v118, %v119
    %121 = vrot.lane.b32.xlu0 %v104, 127
    %v122 = vpop.permute.xlu0 %121
    %v123 = vperm.slane %v41, 5
    %v124 = vmul.f32 %v122, %v123
    %125 = vrot.lane.b32.xlu0 %v104, 121
    %v126 = vpop.permute.xlu0 %125
    %v127 = vperm.slane %v41, 6
    %v128 = vmul.f32 %v126, %v127
    %129 = vrot.lane.b32.xlu0 %v104, 120
    %v130 = vpop.permute.xlu0 %129
    %v131 = vperm.slane %v41, 7
    %v132 = vmul.f32 %v130, %v131
    %133 = vrot.lane.b32.xlu0 %v104, 119
    %v134 = vpop.permute.xlu0 %133
    %v135 = vperm.slane %v42, 0
    %v136 = vmul.f32 %v134, %v135
    %v137 = vld [vmem:[%s5] sm:$0xff]
    %vm138 = vcmask 588800
    %v140 = vsel %vm138, %v137, 0
    %142 = vmatpush.msra.mxu0 0.0
    %143 = vmatpush.msra.mxu0 0.0
    %144 = vmatpush.msra.mxu0 0.0
    %145 = vmatpush.msra.mxu0 0.0
    %146 = vmatpush.msra.mxu0 0.0
    %147 = vmatpush.msra.mxu0 0.0
    %148 = vmatpush.msra.mxu0 0.0
    %149 = vmatpush.msra.mxu0 %v136
    %150 = vmatpush.msra.mxu0 %v132
    %151 = vmatpush.msra.mxu0 %v128
    %152 = vmatpush.msra.mxu0 %v124
    %153 = vmatpush.msra.mxu0 %v104
    %154 = vmatpush.msra.mxu0 %v120
    %155 = vmatpush.msra.mxu0 %v116
    %156 = vmatpush.msra.mxu0 %v112
    %157 = vmatpush.msra.mxu0 %v108
    %158 = vmatmul.f32.gmra.mxu0 %v140
    %v159 = vpop.f32.mrf.mxu0
    %v160 = vadd.f32 0.0, %v159
    %161 = vdwg.mxu0
    %v162 = vmul.f32 %v160, %v160
    %163 = vadd.xlane.f32.xlu0 %v160
    %v164 = vpop.xlane.xlu0 %163
    %165 = vadd.xlane.f32.xlu0 %v162
    %v166 = vpop.xlane.xlu0 %165
    %v167 = vmul.f32 %v164, 0.0078125
    %v168 = vmul.f32 %v166, 0.0078125
    %v169 = vmul.f32 %v167, %v167
    %v170 = vsub.f32 %v168, %v169
    %v171 = vsub.f32 %v160, %v167
    %v172 = vadd.f32 %v170, 1e-05
    %v173 = vrsqrt.pop %v172
    %v174 = vmul.f32 %v173, %v172
    %v175 = vmul.f32 %v174, %v173
    %v176 = vmul.f32 0.5, %v175
    %v177 = vsub.f32 1.5, %v176
    %v178 = vmul.f32 %v173, %v177
    %vm179 = vweird.f32 %v172
    %vm180 = vweird.f32 %v173
    %vm181 = vmor %vm179, %vm180
    %v182 = vsel %vm181, %v173, %v178
    %v183 = vmul.f32 %v171, %v182
    %v184 = vld [vmem:[%s6] sm:$0xff]
    %186 = vset.pattern.permute.xlu0 0
    %187 = vperm.xlu0 %186, %v184
    %v188 = vpop.permute.xlu0 %187
    %v190 = vmul.f32 %v183, %v188
    %v191 = vld [vmem:[%s7] sm:$0xff]
    %193 = vset.pattern.permute.xlu0 0
    %194 = vperm.xlu0 %193, %v191
    %v195 = vpop.permute.xlu0 %194
    %v197 = vadd.f32 %v190, %v195
    %v198 = vmax.f32 %v197, 0.0
    %v199 = vld [vmem:[%s8] sm:$0xff]
    %v200 = vld [vmem:[%s8 + $0x8] sm:$0xff]
    %vm201 = vcmask 64512
    %v203 = vsel %vm201, %v199, 0
    %v206 = vsel %vm201, %v200, 0
    %208 = vmatpush.msra.mxu0 0.0
    %209 = vmatpush.msra.mxu0 0.0
    %210 = vmatpush.msra.mxu0 0.0
    %211 = vmatpush.msra.mxu0 0.0
    %212 = vmatpush.msra.mxu0 0.0
    %213 = vmatpush.msra.mxu0 0.0
    %214 = vmatpush.msra.mxu0 0.0
    %215 = vmatpush.msra.mxu0 0.0
    %216 = vmatpush.msra.mxu0 0.0
    %217 = vmatpush.msra.mxu0 0.0
    %218 = vmatpush.msra.mxu0 0.0
    %219 = vmatpush.msra.mxu0 0.0
    %220 = vmatpush.msra.mxu0 0.0
    %221 = vmatpush.msra.mxu0 0.0
    %222 = vmatpush.msra.mxu0 0.0
    %223 = vmatpush.msra.mxu0 %v198
    %224 = vmatmul.f32.gmra.mxu0 %v203
    %v225 = vpop.f32.mrf.mxu0
    %v226 = vadd.f32 0.0, %v225
    %227 = vmatmul.f32.gmra.mxu0 %v206
    %v228 = vpop.f32.mrf.mxu0
    %v229 = vadd.f32 0.0, %v228
    %230 = vdwg.mxu0
    %v231 = vmul.f32 %v226, %v226
    %v232 = vmul.f32 %v229, %v229
    %233 = vadd.xlane.f32.xlu0 %v226
    %v234 = vpop.xlane.xlu0 %233
    %235 = vadd.xlane.f32.xlu0 %v229
    %v236 = vpop.xlane.xlu0 %235
    %237 = vadd.xlane.f32.xlu0 %v231
    %v238 = vpop.xlane.xlu0 %237
    %239 = vadd.xlane.f32.xlu0 %v232
    %v240 = vpop.xlane.xlu0 %239
    %v241 = vmul.f32 %v234, 0.0078125
    %v242 = vmul.f32 %v236, 0.0078125
    %v243 = vmul.f32 %v238, 0.0078125
    %v244 = vmul.f32 %v240, 0.0078125
    %v245 = vmul.f32 %v241, %v241
    %v246 = vmul.f32 %v242, %v242
    %v247 = vsub.f32 %v243, %v245
    %v248 = vsub.f32 %v244, %v246
    %v249 = vsub.f32 %v226, %v241
    %v250 = vsub.f32 %v229, %v242
    %v251 = vadd.f32 %v247, 1e-05
    %v252 = vadd.f32 %v248, 1e-05
    %v253 = vrsqrt.pop %v251
    %v254 = vmul.f32 %v253, %v251
    %v255 = vmul.f32 %v254, %v253
    %v256 = vmul.f32 0.5, %v255
    %v257 = vsub.f32 1.5, %v256
    %v258 = vmul.f32 %v253, %v257
    %vm259 = vweird.f32 %v251
    %vm260 = vweird.f32 %v253
    %vm261 = vmor %vm259, %vm260
    %v262 = vsel %vm261, %v253, %v258
    %v263 = vrsqrt.pop %v252
    %v264 = vmul.f32 %v263, %v252
    %v265 = vmul.f32 %v264, %v263
    %v266 = vmul.f32 0.5, %v265
    %v267 = vsub.f32 1.5, %v266
    %v268 = vmul.f32 %v263, %v267
    %vm269 = vweird.f32 %v252
    %vm270 = vweird.f32 %v263
    %vm271 = vmor %vm269, %vm270
    %v272 = vsel %vm271, %v263, %v268
    %v273 = vmul.f32 %v249, %v262
    %v274 = vmul.f32 %v250, %v272
    %v275 = vld [vmem:[%s9] sm:$0xff]
    %v276 = vld [vmem:[%s9 + $0x8] sm:$0xff]
    %278 = vset.pattern.permute.xlu0 0
    %279 = vperm.xlu0 %278, %v275
    %v280 = vpop.permute.xlu0 %279
    %283 = vset.pattern.permute.xlu0 0
    %284 = vperm.xlu0 %283, %v276
    %v285 = vpop.permute.xlu0 %284
    %v287 = vmul.f32 %v273, %v280
    %v288 = vmul.f32 %v274, %v285
    %v289 = vld [vmem:[%s10] sm:$0xff]
    %v290 = vld [vmem:[%s10 + $0x8] sm:$0xff]
    %292 = vset.pattern.permute.xlu0 0
    %293 = vperm.xlu0 %292, %v289
    %v294 = vpop.permute.xlu0 %293
    %297 = vset.pattern.permute.xlu0 0
    %298 = vperm.xlu0 %297, %v290
    %v299 = vpop.permute.xlu0 %298
    %v301 = vadd.f32 %v287, %v294
    %v302 = vadd.f32 %v288, %v299
    %v303 = vadd.f32 %v301, %v39
    %v304 = vadd.f32 %v302, %v40
    %v305 = vmax.f32 %v303, 0.0
    %v306 = vmax.f32 %v304, 0.0
    %307 = vst [vmem:[#allocation2] sm:$0xff] %v305
    %308 = vst [vmem:[#allocation2 + $0x8] sm:$0xff] %v306
    // Predicated region
    $region46: #{resnet_block_cm.1} parent=1 // pred_check
      _
    $region47: #{resnet_block_cm.1} parent=1 // pred_check_branch
      %310 = sbr.rel (0) target = $region49
    $region48: #{resnet_block_cm.1} parent=1 // pred_region
      %312 = vsyncadd [#allocation3], 0
      %s313 = sshll.u32 [#allocation2], 4
      %s314 = int_to_ptr.vmem [resolvable:$true] %s313
      %s315 = sshll.u32 %s11, 4
      %s316 = int_to_ptr.hbm [resolvable:$true] %s315
      %321 = dma.vmem_to_hbm [thread:$0]  %s314, 256, %s316, [#allocation3], 128, 128, 8
    $region49: #{resnet_block_cm.1} parent=1 // pred_fallthru
      _
    // Predicated region
    $region50: #{resnet_block_cm.1} parent=1 // pred_check
      _
    $region51: #{resnet_block_cm.1} parent=1 // pred_check_branch
      %323 = sbr.rel (0) target = $region53
    $region52: #{resnet_block_cm.1} parent=1 // pred_region
      %325 = dma.done [#allocation3], 256
    $region53: #{resnet_block_cm.1} parent=1 // pred_fallthru
      _
    %326 = vsyncpa [#allocation3], 1

</llo_original>
